<compile_context>
chip_gen: v6e
topology: v6e:2x2x1
jax: 0.10.0
libtpu: 0.0.40
codegen_flags: <defaults>
</compile_context>

<pallas_src>
import jax
import jax.numpy as jnp
from jax.experimental import pallas as pl
from jax.experimental.pallas import tpu as pltpu


def _round_up(x, m):
    return ((x + m - 1) // m) * m


def _mlp_kernel(x_ref, w1_ref, b1_ref, w2_ref, b2_ref, w3_ref, b3_ref, o_ref):
    # Transposed layout: x_ref is (IN, TB) bf16 with the batch on lanes.
    # Layer 1: (HP, IN)bf16 @ (IN, TB)bf16 -> (HP, TB) f32 accum (MXU);
    # bias (HP, 1) column broadcast + ReLU in f32 (VPU).
    h1 = jnp.dot(w1_ref[...], x_ref[...], preferred_element_type=jnp.float32)
    h1 = jnp.maximum(h1 + b1_ref[...], 0.0)
    # Layer 2: (HP, HP)bf16 @ (HP, TB)bf16 -> f32 accum; bias + ReLU in f32.
    h2 = jnp.dot(w2_ref[...], h1.astype(jnp.bfloat16),
                 preferred_element_type=jnp.float32)
    h2 = jnp.maximum(h2 + b2_ref[...], 0.0)
    # Layer 3: hidden -> 1 as a VPU multiply + sublane reduce (avoids an N=1
    # MXU push/drain).  Result is a lane-dense (1, TB) row -> unmasked,
    # full-width stores.  b3 is a scalar read from SMEM.
    out = jnp.sum(h2 * w3_ref[...], axis=0, keepdims=True) + b3_ref[0, 0]
    o_ref[...] = out.astype(o_ref.dtype)


def nnarx_forward(x, w1, b1, w2, b2, w3, b3, *, tb=2048):
    """Fused MLP forward, PyTorch semantics y = L3(ReLU(L2(ReLU(L1(x))))).

    x : (B, input_dim) f32
    w1: (hidden, input_dim), b1: (hidden,)     -- PyTorch Linear layout
    w2: (hidden, hidden),   b2: (hidden,)
    w3: (1, hidden),        b3: (1,)
    returns (B, 1) f32
    """
    B, in_dim = x.shape
    hidden = w1.shape[0]
    assert w1.shape == (hidden, in_dim)
    assert w2.shape == (hidden, hidden)
    assert w3.shape == (1, hidden)

    # Pad hidden dim to a multiple of 128 (full vreg / MXU occupancy).
    hp = _round_up(hidden, 128)
    # Batch lives on the lane (last) axis -> tile must be a multiple of 128.
    tb = max(128, _round_up(min(tb, _round_up(B, 128)), 128))
    bp = _round_up(B, tb)
    grid = bp // tb

    f32, bf16 = jnp.float32, jnp.bfloat16

    # x transposed to (in_dim, B) and cast to bf16 (half the HBM->VMEM bytes).
    # Only build a zero-padded copy when the batch doesn't divide the tile.
    xt = x.T.astype(bf16)
    if bp != B:
        xt = jnp.zeros((in_dim, bp), bf16).at[:, :B].set(xt)

    # Zero-padding of the hidden dim is exact: padded rows of w1/b1 give
    # ReLU(0) = 0, padded columns/rows of w2 and padded entries of w3 are 0,
    # so padded channels never contribute.  Weights stay in PyTorch (out, in)
    # layout, which is exactly what the transposed kernel consumes.
    w1p = jnp.zeros((hp, in_dim), f32).at[:hidden, :].set(w1).astype(bf16)
    w2p = jnp.zeros((hp, hp), f32).at[:hidden, :hidden].set(w2).astype(bf16)
    b1p = jnp.zeros((hp, 1), f32).at[:hidden, 0].set(b1.reshape(hidden))
    b2p = jnp.zeros((hp, 1), f32).at[:hidden, 0].set(b2.reshape(hidden))
    w3p = jnp.zeros((hp, 1), f32).at[:hidden, 0].set(w3.reshape(hidden))
    b3p = jnp.asarray(b3, f32).reshape(1, 1)

    flops = 2 * bp * (in_dim * hp + hp * hp + hp)
    bytes_accessed = (xt.size * 2 + w1p.size * 2 + w2p.size * 2
                      + (b1p.size + b2p.size + w3p.size + b3p.size) * 4
                      + bp * 4)

    out = pl.pallas_call(
        _mlp_kernel,
        out_shape=jax.ShapeDtypeStruct((1, bp), jnp.float32),
        grid_spec=pltpu.PrefetchScalarGridSpec(
            num_scalar_prefetch=0,
            grid=(grid,),
            in_specs=[
                pl.BlockSpec((in_dim, tb), lambda i: (0, i)),    # x.T: tiled over batch lanes
                pl.BlockSpec((hp, in_dim), lambda i: (0, 0)),    # w1: resident
                pl.BlockSpec((hp, 1), lambda i: (0, 0)),         # b1 col: resident
                pl.BlockSpec((hp, hp), lambda i: (0, 0)),        # w2: resident
                pl.BlockSpec((hp, 1), lambda i: (0, 0)),         # b2 col: resident
                pl.BlockSpec((hp, 1), lambda i: (0, 0)),         # w3 col: resident
                pl.BlockSpec(memory_space=pltpu.MemorySpace.SMEM),  # b3 scalar
            ],
            out_specs=pl.BlockSpec((1, tb), lambda i: (0, i)),   # lane-dense output row
        ),
        compiler_params=pltpu.CompilerParams(
            dimension_semantics=("parallel",)),   # shard batch tiles across TCs (v7x)
        cost_estimate=pl.CostEstimate(
            flops=flops, transcendentals=0, bytes_accessed=bytes_accessed),
    )(xt, w1p, b1p, w2p, b2p, w3p, b3p)
    return out[0, :B].reshape(B, 1)


def init_params(key, input_dim, hidden_dim):
    """Deterministic synthetic init (PyTorch Linear fan-in uniform),
    stored in native PyTorch (out, in) layout."""
    k1, k2, k3, k4, k5, k6 = jax.random.split(key, 6)

    def uniform(k, shape, fan_in):
        bound = 1.0 / jnp.sqrt(fan_in)
        return jax.random.uniform(k, shape, jnp.float32, -bound, bound)

    w1 = uniform(k1, (hidden_dim, input_dim), input_dim)
    b1 = uniform(k2, (hidden_dim,), input_dim)
    w2 = uniform(k3, (hidden_dim, hidden_dim), hidden_dim)
    b2 = uniform(k4, (hidden_dim,), hidden_dim)
    w3 = uniform(k5, (1, hidden_dim), hidden_dim)
    b3 = uniform(k6, (1,), hidden_dim)
    return w1, b1, w2, b2, w3, b3


if __name__ == "__main__":
    # NNARXModel(input_dim = lags * 14): lags=4 -> input_dim=56, hidden=64.
    lags = 4
    input_dim = lags * 14      # 56
    hidden_dim = 64
    batch = 256                # small demo batch; tb=128 -> 2 grid steps

    key = jax.random.PRNGKey(0)
    kx, kp = jax.random.split(key)
    x = jax.random.normal(kx, (batch, input_dim), dtype=jnp.float32)
    w1, b1, w2, b2, w3, b3 = init_params(kp, input_dim, hidden_dim)

    out = nnarx_forward(x, w1, b1, w2, b2, w3, b3, tb=128)
    out = jax.block_until_ready(out)

    # Pure-JAX reference with the same numerics (bf16 matmul operands,
    # f32 accumulation / epilogue) and PyTorch semantics (x @ W.T + b).
    bf = jnp.bfloat16
    ref = jnp.maximum(
        jnp.dot(x.astype(bf), w1.T.astype(bf),
                preferred_element_type=jnp.float32) + b1[None, :], 0.0)
    ref = jnp.maximum(
        jnp.dot(ref.astype(bf), w2.T.astype(bf),
                preferred_element_type=jnp.float32) + b2[None, :], 0.0)
    ref = ref @ w3.T + b3[None, :]

    assert out.shape == (batch, 1)
    assert jnp.all(jnp.isfinite(out))
    assert jnp.allclose(out, ref, atol=2e-3, rtol=2e-3)

    print("KERNEL_OK")
</pallas_src>

<mosaic_0001>
module attributes {stable_mosaic.version = 11 : i64} {
  func.func @_mlp_kernel(%arg0: i32, %arg1: memref<56x128xbf16, #tpu.memory_space<vmem>>, %arg2: memref<128x56xbf16, #tpu.memory_space<vmem>>, %arg3: memref<128x1xf32, #tpu.memory_space<vmem>>, %arg4: memref<128x128xbf16, #tpu.memory_space<vmem>>, %arg5: memref<128x1xf32, #tpu.memory_space<vmem>>, %arg6: memref<128x1xf32, #tpu.memory_space<vmem>>, %arg7: memref<1x1xf32, #tpu.memory_space<smem>>, %arg8: memref<1x128xf32, #tpu.memory_space<vmem>>) attributes {dimension_semantics = [#tpu.dimension_semantics<parallel>], iteration_bounds = array<i64: 2>, scalar_prefetch = 0 : i64, scratch_operands = 0 : i64, tpu.core_type = #tpu.core_type<tc>, window_params = [{transform_indices = @transform_0, window_bounds = array<i64: 56, 128>}, {pipeline_mode = #tpu.pipeline_mode<synchronous>, transform_indices = @transform_1, window_bounds = array<i64: 128, 56>}, {pipeline_mode = #tpu.pipeline_mode<synchronous>, transform_indices = @transform_2, window_bounds = array<i64: 128, 1>}, {pipeline_mode = #tpu.pipeline_mode<synchronous>, transform_indices = @transform_3, window_bounds = array<i64: 128, 128>}, {pipeline_mode = #tpu.pipeline_mode<synchronous>, transform_indices = @transform_4, window_bounds = array<i64: 128, 1>}, {pipeline_mode = #tpu.pipeline_mode<synchronous>, transform_indices = @transform_5, window_bounds = array<i64: 128, 1>}, {transform_indices = @transform_6, window_bounds = array<i64: 1, 1>}, {transform_indices = @transform_7, window_bounds = array<i64: 1, 128>}]} {
    %c0 = arith.constant 0 : index
    %c0_0 = arith.constant 0 : index
    %0 = vector.load %arg2[%c0, %c0_0] : memref<128x56xbf16, #tpu.memory_space<vmem>>, vector<128x56xbf16>
    %c0_1 = arith.constant 0 : index
    %c0_2 = arith.constant 0 : index
    %1 = vector.load %arg1[%c0_1, %c0_2] : memref<56x128xbf16, #tpu.memory_space<vmem>>, vector<56x128xbf16>
    %cst = arith.constant dense<0.000000e+00> : vector<128x128xf32>
    %2 = tpu.matmul %0, %1, %cst {dimension_numbers = #tpu.dot_dimension_numbers<[1], [0], [0], [1], [0, 0, 1, 1], [], []>} : vector<128x56xbf16>, vector<56x128xbf16>, vector<128x128xf32> -> vector<128x128xf32>
    %c0_3 = arith.constant 0 : index
    %c0_4 = arith.constant 0 : index
    %3 = vector.load %arg3[%c0_3, %c0_4] : memref<128x1xf32, #tpu.memory_space<vmem>>, vector<128x1xf32>
    %4 = vector.broadcast %3 : vector<128x1xf32> to vector<128x128xf32>
    %5 = arith.addf %2, %4 : vector<128x128xf32>
    %cst_5 = arith.constant 0.000000e+00 : f32
    %6 = vector.broadcast %cst_5 : f32 to vector<128x128xf32>
    %7 = arith.maximumf %5, %6 : vector<128x128xf32>
    %c0_6 = arith.constant 0 : index
    %c0_7 = arith.constant 0 : index
    %8 = vector.load %arg4[%c0_6, %c0_7] : memref<128x128xbf16, #tpu.memory_space<vmem>>, vector<128x128xbf16>
    %9 = arith.truncf %7 : vector<128x128xf32> to vector<128x128xbf16>
    %cst_8 = arith.constant dense<0.000000e+00> : vector<128x128xf32>
    %10 = tpu.matmul %8, %9, %cst_8 {dimension_numbers = #tpu.dot_dimension_numbers<[1], [0], [0], [1], [0, 0, 1, 1], [], []>} : vector<128x128xbf16>, vector<128x128xbf16>, vector<128x128xf32> -> vector<128x128xf32>
    %c0_9 = arith.constant 0 : index
    %c0_10 = arith.constant 0 : index
    %11 = vector.load %arg5[%c0_9, %c0_10] : memref<128x1xf32, #tpu.memory_space<vmem>>, vector<128x1xf32>
    %12 = vector.broadcast %11 : vector<128x1xf32> to vector<128x128xf32>
    %13 = arith.addf %10, %12 : vector<128x128xf32>
    %cst_11 = arith.constant 0.000000e+00 : f32
    %14 = vector.broadcast %cst_11 : f32 to vector<128x128xf32>
    %15 = arith.maximumf %13, %14 : vector<128x128xf32>
    %c0_12 = arith.constant 0 : index
    %c0_13 = arith.constant 0 : index
    %16 = vector.load %arg6[%c0_12, %c0_13] : memref<128x1xf32, #tpu.memory_space<vmem>>, vector<128x1xf32>
    %17 = vector.broadcast %16 : vector<128x1xf32> to vector<128x128xf32>
    %18 = arith.mulf %15, %17 : vector<128x128xf32>
    %cst_14 = arith.constant dense<0.000000e+00> : vector<128xf32>
    %19 = vector.multi_reduction <add>, %18, %cst_14 [0] : vector<128x128xf32> to vector<128xf32>
    %20 = vector.shape_cast %19 : vector<128xf32> to vector<1x128xf32>
    %c0_15 = arith.constant 0 : index
    %c0_16 = arith.constant 0 : index
    %21 = memref.load %arg7[%c0_15, %c0_16] : memref<1x1xf32, #tpu.memory_space<smem>>
    %22 = vector.broadcast %21 : f32 to vector<1x128xf32>
    %23 = arith.addf %20, %22 : vector<1x128xf32>
    %c0_17 = arith.constant 0 : index
    %c0_18 = arith.constant 0 : index
    %24 = vector.load %arg8[%c0_17, %c0_18] : memref<1x128xf32, #tpu.memory_space<vmem>>, vector<1x128xf32>
    tpu.vector_store %arg8[%c0_17, %c0_18], %23 {strides = array<i32>} : memref<1x128xf32, #tpu.memory_space<vmem>>, vector<1x128xf32>,
    return
  }
  func.func @transform_0(%arg0: i32) -> (i32, i32) {
    %c0_i32 = arith.constant 0 : i32
    %c0_i32_0 = arith.constant 0 : i32
    return %c0_i32, %arg0 : i32, i32
  }
  func.func @transform_1(%arg0: i32) -> (i32, i32) {
    %c0_i32 = arith.constant 0 : i32
    %c0_i32_0 = arith.constant 0 : i32
    %c0_i32_1 = arith.constant 0 : i32
    return %c0_i32, %c0_i32_0 : i32, i32
  }
  func.func @transform_2(%arg0: i32) -> (i32, i32) {
    %c0_i32 = arith.constant 0 : i32
    %c0_i32_0 = arith.constant 0 : i32
    %c0_i32_1 = arith.constant 0 : i32
    return %c0_i32, %c0_i32_0 : i32, i32
  }
  func.func @transform_3(%arg0: i32) -> (i32, i32) {
    %c0_i32 = arith.constant 0 : i32
    %c0_i32_0 = arith.constant 0 : i32
    %c0_i32_1 = arith.constant 0 : i32
    return %c0_i32, %c0_i32_0 : i32, i32
  }
  func.func @transform_4(%arg0: i32) -> (i32, i32) {
    %c0_i32 = arith.constant 0 : i32
    %c0_i32_0 = arith.constant 0 : i32
    %c0_i32_1 = arith.constant 0 : i32
    return %c0_i32, %c0_i32_0 : i32, i32
  }
  func.func @transform_5(%arg0: i32) -> (i32, i32) {
    %c0_i32 = arith.constant 0 : i32
    %c0_i32_0 = arith.constant 0 : i32
    %c0_i32_1 = arith.constant 0 : i32
    return %c0_i32, %c0_i32_0 : i32, i32
  }
  func.func @transform_6(%arg0: i32) -> (i32, i32) {
    %c0_i32 = arith.constant 0 : i32
    %c0_i32_0 = arith.constant 0 : i32
    %c0_i32_1 = arith.constant 0 : i32
    return %c0_i32, %c0_i32_0 : i32, i32
  }
  func.func @transform_7(%arg0: i32) -> (i32, i32) {
    %c0_i32 = arith.constant 0 : i32
    %c0_i32_0 = arith.constant 0 : i32
    return %c0_i32, %arg0 : i32, i32
  }
}

</mosaic_0001>

<llo_original>
// kernel: tpu_custom_call.1
$region0: #{tpu_custom_call.1}
  #allocation0 [shape = 'u32[]', space=smem, size = 0x4, offset = 0x4, fixed_abs, tag = 'smem constant byte address 0x4 - core index']
  #allocation1 [shape = 'u32[144,128]{1,0:T(1,128)}', space=vmem, size = 0x12000, scoped, tag = 'internal scratch']
  #allocation2 [shape = 'f32[1,1]{1,0:T(1,128)S(6)}', space=smem, size = 0x200, scoped, tag = 'scoped memory for tpu_custom_call.1']
  %s0 = inlined_call_operand.vmem [shape: bf16[56,256], index: 0, kind: input, shape index: {}]
  %s1 = inlined_call_operand.vmem [shape: bf16[128,56], index: 1, kind: input, shape index: {}]
  %s2 = inlined_call_operand.vmem [shape: f32[128,1], index: 2, kind: input, shape index: {}]
  %s3 = inlined_call_operand.vmem [shape: bf16[128,128], index: 3, kind: input, shape index: {}]
  %s4 = inlined_call_operand.vmem [shape: f32[128,1], index: 4, kind: input, shape index: {}]
  %s5 = inlined_call_operand.vmem [shape: f32[128,1], index: 5, kind: input, shape index: {}]
  %s6 = inlined_call_operand.<no memory space> [shape: f32[1,1], index: 6, kind: input, shape index: {}]
  %s7 = inlined_call_operand.hbm [shape: f32[1,256], index: 7, kind: output, shape index: {}]
  %s8 = sld [smem:[#allocation0]]
  $region102: #{tpu_custom_call.1} parent=0
    _
  %s10 = ssub.s32 1, %s8
  %s11 = scalar_select 0, %s10, %s8
  %12 = sst [smem:[#allocation2]] %s6
  $region1: #{tpu_custom_call.1} parent=0
    #allocation3 [shape = 'u8[28672]{0}', space=vmem, size = 0x7000, scoped, tag = 'input window, operand 0']
    #allocation4 [shape = 'u8[1024]{0}', space=vmem, size = 0x400, scoped, tag = 'output window, operand 0']
    #allocation5 [shape = 's32[2]{0}', space=sflag, size = 0x8, scoped, tag = 'scoped memory for tpu_custom_call.1']
    %13 = vsyncpa [#allocation5], 0
    %s14 = scalar_lea.sflag [#allocation5], 1
    %15 = vsyncpa %s14, 0
    loop: start=0, step=1, limit=4
    $region2: #{tpu_custom_call.1} parent=1 // loop_pre_header
      _
    $region3: #{tpu_custom_call.1} parent=1 // loop_header
      %s17 = sphi 0, %s21
      %p18 = scmp.ge.s32.totalorder %s17, 4
      %s27 = sphi 0, %s29
      %s30 = sphi 0, %s27
      %s31 = sphi 0, %s30
      %s47 = sphi 0, %s31
      %s51 = sphi 0, %s51
      %s53 = sphi 0, %s51
      %s54 = sphi 0, %s53
      %s68 = sphi 0, %s54
      %s72 = sphi 0, %s72
      %s74 = sphi 0, %s72
      %s75 = sphi 0, %s74
      %s89 = sphi 0, %s75
      %s93 = sphi 0, %s93
      %s95 = sphi 0, %s93
      %s96 = sphi 0, %s95
      %s110 = sphi 0, %s96
      %s114 = sphi 0, %s114
      %s116 = sphi 0, %s114
      %s117 = sphi 0, %s116
      %s131 = sphi 0, %s117
      %s135 = sphi 0, %s135
      %s137 = sphi 0, %s135
      %s138 = sphi 0, %s137
      %s152 = sphi 0, %s138
      %s156 = sphi 0, %s156
      %s158 = sphi 0, %s156
      %s159 = sphi 0, %s158
      %s173 = sphi 0, %s159
      %s179 = sphi 0, %s181
      %s182 = sphi 0, %s179
      %s183 = sphi 0, %s182
      %s199 = sphi 0, %s183
    $region4: #{tpu_custom_call.1} parent=1 // loop_header_branch
      %20 = sbr.rel (%p18) target = $region8
    $region5: #{tpu_custom_call.1} parent=1 // loop_body
      %s22 = ssub.s32 %s17, 1
      %s23 = ssub.s32 %s17, 2
      %s24 = sadd.s32 %s17, 1
      %s25 = ssub.s32 %s17, %s24
      %p26 = scmp.eq.s32.totalorder %s25, 0
      %s28 = sadd.s32 %s27, 1
      %s29 = scalar_select %p26, %s27, %s28
      %p32 = pneg %p26
      %p33 = scmp.eq.s32.totalorder %s17, 1
      %p34 = por %p32, %p33
      %p35 = scmp.ne.s32.totalorder %s27, %s30
      %p36 = scmp.eq.s32.totalorder %s17, 0
      %p37 = por %p35, %p36
      %p38 = scmp.ne.s32.totalorder %s27, %s30
      %p39 = scmp.eq.s32.totalorder %s22, 1
      %p40 = por %p38, %p39
      %p41 = scmp.ne.s32.totalorder %s30, %s31
      %p42 = scmp.eq.s32.totalorder %s22, 0
      %p43 = por %p41, %p42
      %p44 = scmp.ne.s32.totalorder %s30, %s31
      %p45 = scmp.eq.s32.totalorder %s23, 1
      %p46 = por %p44, %p45
      %p48 = scmp.ne.s32.totalorder %s31, %s47
      %p49 = scmp.eq.s32.totalorder %s23, 0
      %p50 = por %p48, %p49
      %s52 = sadd.s32 %s51, 1
      %p55 = scmp.eq.s32.totalorder %s17, 1
      %p56 = scmp.ne.s32.totalorder %s51, %s53
      %p57 = scmp.eq.s32.totalorder %s17, 0
      %p58 = por %p56, %p57
      %p59 = scmp.ne.s32.totalorder %s51, %s53
      %p60 = scmp.eq.s32.totalorder %s22, 1
      %p61 = por %p59, %p60
      %p62 = scmp.ne.s32.totalorder %s53, %s54
      %p63 = scmp.eq.s32.totalorder %s22, 0
      %p64 = por %p62, %p63
      %p65 = scmp.ne.s32.totalorder %s53, %s54
      %p66 = scmp.eq.s32.totalorder %s23, 1
      %p67 = por %p65, %p66
      %p69 = scmp.ne.s32.totalorder %s54, %s68
      %p70 = scmp.eq.s32.totalorder %s23, 0
      %p71 = por %p69, %p70
      %s73 = sadd.s32 %s72, 1
      %p76 = scmp.eq.s32.totalorder %s17, 1
      %p77 = scmp.ne.s32.totalorder %s72, %s74
      %p78 = scmp.eq.s32.totalorder %s17, 0
      %p79 = por %p77, %p78
      %p80 = scmp.ne.s32.totalorder %s72, %s74
      %p81 = scmp.eq.s32.totalorder %s22, 1
      %p82 = por %p80, %p81
      %p83 = scmp.ne.s32.totalorder %s74, %s75
      %p84 = scmp.eq.s32.totalorder %s22, 0
      %p85 = por %p83, %p84
      %p86 = scmp.ne.s32.totalorder %s74, %s75
      %p87 = scmp.eq.s32.totalorder %s23, 1
      %p88 = por %p86, %p87
      %p90 = scmp.ne.s32.totalorder %s75, %s89
      %p91 = scmp.eq.s32.totalorder %s23, 0
      %p92 = por %p90, %p91
      %s94 = sadd.s32 %s93, 1
      %p97 = scmp.eq.s32.totalorder %s17, 1
      %p98 = scmp.ne.s32.totalorder %s93, %s95
      %p99 = scmp.eq.s32.totalorder %s17, 0
      %p100 = por %p98, %p99
      %p101 = scmp.ne.s32.totalorder %s93, %s95
      %p102 = scmp.eq.s32.totalorder %s22, 1
      %p103 = por %p101, %p102
      %p104 = scmp.ne.s32.totalorder %s95, %s96
      %p105 = scmp.eq.s32.totalorder %s22, 0
      %p106 = por %p104, %p105
      %p107 = scmp.ne.s32.totalorder %s95, %s96
      %p108 = scmp.eq.s32.totalorder %s23, 1
      %p109 = por %p107, %p108
      %p111 = scmp.ne.s32.totalorder %s96, %s110
      %p112 = scmp.eq.s32.totalorder %s23, 0
      %p113 = por %p111, %p112
      %s115 = sadd.s32 %s114, 1
      %p118 = scmp.eq.s32.totalorder %s17, 1
      %p119 = scmp.ne.s32.totalorder %s114, %s116
      %p120 = scmp.eq.s32.totalorder %s17, 0
      %p121 = por %p119, %p120
      %p122 = scmp.ne.s32.totalorder %s114, %s116
      %p123 = scmp.eq.s32.totalorder %s22, 1
      %p124 = por %p122, %p123
      %p125 = scmp.ne.s32.totalorder %s116, %s117
      %p126 = scmp.eq.s32.totalorder %s22, 0
      %p127 = por %p125, %p126
      %p128 = scmp.ne.s32.totalorder %s116, %s117
      %p129 = scmp.eq.s32.totalorder %s23, 1
      %p130 = por %p128, %p129
      %p132 = scmp.ne.s32.totalorder %s117, %s131
      %p133 = scmp.eq.s32.totalorder %s23, 0
      %p134 = por %p132, %p133
      %s136 = sadd.s32 %s135, 1
      %p139 = scmp.eq.s32.totalorder %s17, 1
      %p140 = scmp.ne.s32.totalorder %s135, %s137
      %p141 = scmp.eq.s32.totalorder %s17, 0
      %p142 = por %p140, %p141
      %p143 = scmp.ne.s32.totalorder %s135, %s137
      %p144 = scmp.eq.s32.totalorder %s22, 1
      %p145 = por %p143, %p144
      %p146 = scmp.ne.s32.totalorder %s137, %s138
      %p147 = scmp.eq.s32.totalorder %s22, 0
      %p148 = por %p146, %p147
      %p149 = scmp.ne.s32.totalorder %s137, %s138
      %p150 = scmp.eq.s32.totalorder %s23, 1
      %p151 = por %p149, %p150
      %p153 = scmp.ne.s32.totalorder %s138, %s152
      %p154 = scmp.eq.s32.totalorder %s23, 0
      %p155 = por %p153, %p154
      %s157 = sadd.s32 %s156, 1
      %p160 = scmp.eq.s32.totalorder %s17, 1
      %p161 = scmp.ne.s32.totalorder %s156, %s158
      %p162 = scmp.eq.s32.totalorder %s17, 0
      %p163 = por %p161, %p162
      %p164 = scmp.ne.s32.totalorder %s156, %s158
      %p165 = scmp.eq.s32.totalorder %s22, 1
      %p166 = por %p164, %p165
      %p167 = scmp.ne.s32.totalorder %s158, %s159
      %p168 = scmp.eq.s32.totalorder %s22, 0
      %p169 = por %p167, %p168
      %p170 = scmp.ne.s32.totalorder %s158, %s159
      %p171 = scmp.eq.s32.totalorder %s23, 1
      %p172 = por %p170, %p171
      %p174 = scmp.ne.s32.totalorder %s159, %s173
      %p175 = scmp.eq.s32.totalorder %s23, 0
      %p176 = por %p174, %p175
      %s177 = ssub.s32 %s17, %s24
      %p178 = scmp.eq.s32.totalorder %s177, 0
      %s180 = sadd.s32 %s179, 1
      %s181 = scalar_select %p178, %s179, %s180
      %p184 = pneg %p178
      %p185 = scmp.eq.s32.totalorder %s17, 1
      %p186 = por %p184, %p185
      %p187 = scmp.ne.s32.totalorder %s179, %s182
      %p188 = scmp.eq.s32.totalorder %s17, 0
      %p189 = por %p187, %p188
      %p190 = scmp.ne.s32.totalorder %s179, %s182
      %p191 = scmp.eq.s32.totalorder %s22, 1
      %p192 = por %p190, %p191
      %p193 = scmp.ne.s32.totalorder %s182, %s183
      %p194 = scmp.eq.s32.totalorder %s22, 0
      %p195 = por %p193, %p194
      %p196 = scmp.ne.s32.totalorder %s182, %s183
      %p197 = scmp.eq.s32.totalorder %s23, 1
      %p198 = por %p196, %p197
      %p200 = scmp.ne.s32.totalorder %s183, %s199
      %p201 = scmp.eq.s32.totalorder %s23, 0
      %p202 = por %p200, %p201
      %p203 = scmp.le.s32.totalorder 1, %s17
      %p204 = scmp.lt.s32.totalorder %s17, 3
      %p205 = pnand %p203, %p204
      %p206 = pneg %p205
      // Predicated region
      $region9: #{tpu_custom_call.1} parent=5 // pred_check
        _
      $region10: #{tpu_custom_call.1} parent=5 // pred_check_branch
        %208 = sbr.rel (%p205) target = $region12
      $region11: #{tpu_custom_call.1} parent=5 // pred_region
        %s209 = ssub.s32 %s17, 1
        // Predicated region
        $region13: #{tpu_custom_call.1} parent=11 // pred_check
          %p210 = pneg %p64
        $region14: #{tpu_custom_call.1} parent=11 // pred_check_branch
          %212 = sbr.rel (%p210) target = $region16
        $region15: #{tpu_custom_call.1} parent=11 // pred_region
          _
        $region16: #{tpu_custom_call.1} parent=11 // pred_fallthru
          _
        // Predicated region
        $region17: #{tpu_custom_call.1} parent=11 // pred_check
          %p213 = pneg %p85
        $region18: #{tpu_custom_call.1} parent=11 // pred_check_branch
          %215 = sbr.rel (%p213) target = $region20
        $region19: #{tpu_custom_call.1} parent=11 // pred_region
          _
        $region20: #{tpu_custom_call.1} parent=11 // pred_fallthru
          _
        // Predicated region
        $region21: #{tpu_custom_call.1} parent=11 // pred_check
          %p216 = pneg %p106
        $region22: #{tpu_custom_call.1} parent=11 // pred_check_branch
          %218 = sbr.rel (%p216) target = $region24
        $region23: #{tpu_custom_call.1} parent=11 // pred_region
          _
        $region24: #{tpu_custom_call.1} parent=11 // pred_fallthru
          _
        // Predicated region
        $region25: #{tpu_custom_call.1} parent=11 // pred_check
          %p219 = pneg %p127
        $region26: #{tpu_custom_call.1} parent=11 // pred_check_branch
          %221 = sbr.rel (%p219) target = $region28
        $region27: #{tpu_custom_call.1} parent=11 // pred_region
          _
        $region28: #{tpu_custom_call.1} parent=11 // pred_fallthru
          _
        // Predicated region
        $region29: #{tpu_custom_call.1} parent=11 // pred_check
          %p222 = pneg %p148
        $region30: #{tpu_custom_call.1} parent=11 // pred_check_branch
          %224 = sbr.rel (%p222) target = $region32
        $region31: #{tpu_custom_call.1} parent=11 // pred_region
          _
        $region32: #{tpu_custom_call.1} parent=11 // pred_fallthru
          _
        // Predicated region
        $region33: #{tpu_custom_call.1} parent=11 // pred_check
          %p225 = pneg %p169
        $region34: #{tpu_custom_call.1} parent=11 // pred_check_branch
          %227 = sbr.rel (%p225) target = $region36
        $region35: #{tpu_custom_call.1} parent=11 // pred_region
          _
        $region36: #{tpu_custom_call.1} parent=11 // pred_fallthru
          _
      $region12: #{tpu_custom_call.1} parent=5 // pred_fallthru
        _
      %p228 = scmp.lt.s32.totalorder %s17, 2
      // Predicated region
      $region37: #{tpu_custom_call.1} parent=5 // pred_check
        %p229 = pneg %p228
      $region38: #{tpu_custom_call.1} parent=5 // pred_check_branch
        %231 = sbr.rel (%p229) target = $region40
      $region39: #{tpu_custom_call.1} parent=5 // pred_region
        // Predicated region
        $region41: #{tpu_custom_call.1} parent=39 // pred_check
          %p232 = pneg %p37
        $region42: #{tpu_custom_call.1} parent=39 // pred_check_branch
          %234 = sbr.rel (%p232) target = $region44
        $region43: #{tpu_custom_call.1} parent=39 // pred_region
          %s235 = sand.u32 %s27, 1
          %s236 = sand.u32 %s27, 1
          %s237 = smul.addr %s236, 28
          %s238 = scalar_lea.vmem [#allocation3], %s237
          %s239 = smul.addr %s17, 4
          %s240 = scalar_lea.vmem %s0, %s239
          // Predicated region
          $region45: #{tpu_custom_call.1} parent=43 // pred_check
            _
          $region46: #{tpu_custom_call.1} parent=43 // pred_check_branch
            %242 = sbr.rel (0) target = $region48
          $region47: #{tpu_custom_call.1} parent=43 // pred_region
            // Predicated region
            $region49: #{tpu_custom_call.1} parent=47 // pred_check
              _
            $region50: #{tpu_custom_call.1} parent=47 // pred_check_branch
              %244 = sbr.rel target = $region52
            $region51: #{tpu_custom_call.1} parent=47 // pred_region
              // Predicated region
              $region64: #{tpu_custom_call.1} parent=51 // pred_check
                _
              $region65: #{tpu_custom_call.1} parent=51 // pred_check_branch
                %272 = sbr.rel (0) target = $region67
              $region66: #{tpu_custom_call.1} parent=51 // pred_region
                loop: start=0, step=1, limit=1
                $region68: #{tpu_custom_call.1} parent=66 // loop_pre_header
                  _
                $region69: #{tpu_custom_call.1} parent=66 // loop_header
                  %s274 = sphi 0, %s278
                  %p275 = scmp.ge.s32.totalorder %s274, 1
                  %s279 = sphi %s240, %s240
                  %s280 = sphi %s238, %s238
                $region70: #{tpu_custom_call.1} parent=66 // loop_header_branch
                  %277 = sbr.rel (%p275) target = $region74
                $region71: #{tpu_custom_call.1} parent=66 // loop_body
                  _
                $region72: #{tpu_custom_call.1} parent=66 // loop_footer
                  %s278 = sadd.s32 1, %s274
                $region73: #{tpu_custom_call.1} parent=66 // loop_footer_branch
                  %273 = sbr.rel target = $region69
                $region74: #{tpu_custom_call.1} parent=66 // loop_exit
                  _
                %s282 = ssub.s32 16, 1
                loop: start=0, step=1, limit=1
                $region75: #{tpu_custom_call.1} parent=66 // loop_pre_header
                  _
                $region76: #{tpu_custom_call.1} parent=66 // loop_header
                  %s284 = sphi 0, %s288
                  %p285 = scmp.ge.s32.totalorder %s284, 1
                  %s289 = sphi %s240, %s240
                  %s290 = sphi %s238, %s238
                $region77: #{tpu_custom_call.1} parent=66 // loop_header_branch
                  %287 = sbr.rel (%p285) target = $region81
                $region78: #{tpu_custom_call.1} parent=66 // loop_body
                  %v291 = vld [vmem:[%s289] sm:%s282]
                  %292 = vst [vmem:[%s290] sm:%s282] %v291
                  %v293 = vld [vmem:[%s289 + $0x8] sm:%s282]
                  %294 = vst [vmem:[%s290 + $0x4] sm:%s282] %v293
                  %v295 = vld [vmem:[%s289 + $0x10] sm:%s282]
                  %296 = vst [vmem:[%s290 + $0x8] sm:%s282] %v295
                  %v297 = vld [vmem:[%s289 + $0x18] sm:%s282]
                  %298 = vst [vmem:[%s290 + $0xc] sm:%s282] %v297
                  %v299 = vld [vmem:[%s289 + $0x20] sm:%s282]
                  %300 = vst [vmem:[%s290 + $0x10] sm:%s282] %v299
                  %v301 = vld [vmem:[%s289 + $0x28] sm:%s282]
                  %302 = vst [vmem:[%s290 + $0x14] sm:%s282] %v301
                  %v303 = vld [vmem:[%s289 + $0x30] sm:%s282]
                  %304 = vst [vmem:[%s290 + $0x18] sm:%s282] %v303
                $region79: #{tpu_custom_call.1} parent=66 // loop_footer
                  %s288 = sadd.s32 1, %s284
                $region80: #{tpu_custom_call.1} parent=66 // loop_footer_branch
                  %283 = sbr.rel target = $region76
                $region81: #{tpu_custom_call.1} parent=66 // loop_exit
                  _
              $region67: #{tpu_custom_call.1} parent=51 // pred_fallthru
                _
            $region52: #{tpu_custom_call.1} parent=47 // pred_fallthru
              _
            // Predicated region
            $region53: #{tpu_custom_call.1} parent=47 // pred_check
              _
            $region54: #{tpu_custom_call.1} parent=47 // pred_check_branch
              %246 = sbr.rel (0) target = $region56
            $region55: #{tpu_custom_call.1} parent=47 // pred_region
              %s248 = ssub.s32 16, 1
              loop: start=0, step=1, limit=1
              $region57: #{tpu_custom_call.1} parent=55 // loop_pre_header
                _
              $region58: #{tpu_custom_call.1} parent=55 // loop_header
                %s250 = sphi 0, %s254
                %p251 = scmp.ge.s32.totalorder %s250, 1
                %s255 = sphi %s240, %s240
                %s256 = sphi %s238, %s238
              $region59: #{tpu_custom_call.1} parent=55 // loop_header_branch
                %253 = sbr.rel (%p251) target = $region63
              $region60: #{tpu_custom_call.1} parent=55 // loop_body
                %v257 = vld [vmem:[%s255] sm:%s248]
                %258 = vst [vmem:[%s256] sm:%s248] %v257
                %v259 = vld [vmem:[%s255 + $0x8] sm:%s248]
                %260 = vst [vmem:[%s256 + $0x4] sm:%s248] %v259
                %v261 = vld [vmem:[%s255 + $0x10] sm:%s248]
                %262 = vst [vmem:[%s256 + $0x8] sm:%s248] %v261
                %v263 = vld [vmem:[%s255 + $0x18] sm:%s248]
                %264 = vst [vmem:[%s256 + $0xc] sm:%s248] %v263
                %v265 = vld [vmem:[%s255 + $0x20] sm:%s248]
                %266 = vst [vmem:[%s256 + $0x10] sm:%s248] %v265
                %v267 = vld [vmem:[%s255 + $0x28] sm:%s248]
                %268 = vst [vmem:[%s256 + $0x14] sm:%s248] %v267
                %v269 = vld [vmem:[%s255 + $0x30] sm:%s248]
                %270 = vst [vmem:[%s256 + $0x18] sm:%s248] %v269
              $region61: #{tpu_custom_call.1} parent=55 // loop_footer
                %s254 = sadd.s32 1, %s250
              $region62: #{tpu_custom_call.1} parent=55 // loop_footer_branch
                %249 = sbr.rel target = $region58
              $region63: #{tpu_custom_call.1} parent=55 // loop_exit
                _
            $region56: #{tpu_custom_call.1} parent=47 // pred_fallthru
              _
          $region48: #{tpu_custom_call.1} parent=43 // pred_fallthru
            _
          %305 = vnop
        $region44: #{tpu_custom_call.1} parent=39 // pred_fallthru
          _
      $region40: #{tpu_custom_call.1} parent=5 // pred_fallthru
        _
      %p306 = scmp.le.s32.totalorder 1, %s17
      %p307 = scmp.lt.s32.totalorder %s17, 3
      %p308 = pnand %p306, %p307
      %p309 = pneg %p308
      // Predicated region
      $region82: #{tpu_custom_call.1} parent=5 // pred_check
        _
      $region83: #{tpu_custom_call.1} parent=5 // pred_check_branch
        %311 = sbr.rel (%p308) target = $region85
      $region84: #{tpu_custom_call.1} parent=5 // pred_region
        %s312 = ssub.s32 %s17, 1
        %s313 = sand.u32 %s30, 1
        %s314 = sand.u32 %s30, 1
        %s315 = smul.addr %s314, 28
        %s316 = scalar_lea.vmem [#allocation3], %s315
        // Predicated region
        $region86: #{tpu_custom_call.1} parent=84 // pred_check
          %p317 = pneg %p43
        $region87: #{tpu_custom_call.1} parent=84 // pred_check_branch
          %319 = sbr.rel (%p317) target = $region89
        $region88: #{tpu_custom_call.1} parent=84 // pred_region
          _
        $region89: #{tpu_custom_call.1} parent=84 // pred_fallthru
          _
        %s320 = sand.u32 %s30, 1
        %s321 = sand.u32 %s30, 1
        %s322 = smul.addr %s321, 28
        %s323 = scalar_lea.vmem [#allocation3], %s322
        %p324 = pneg %p43
        %p325 = pneg %p40
        %p326 = pneg %p64
        %p327 = pneg %p61
        %p328 = pneg %p85
        %p329 = pneg %p82
        %p330 = pneg %p106
        %p331 = pneg %p103
        %p332 = pneg %p127
        %p333 = pneg %p124
        %p334 = pneg %p148
        %p335 = pneg %p145
        %p336 = pneg %p169
        %p337 = pneg %p166
        %p338 = pneg %p195
        %p339 = pneg %p192
        %s340 = sand.u32 %s182, 1
        %s341 = scalar_lea.sflag [#allocation5], %s340
        %s342 = sand.u32 %s182, 1
        %s343 = scalar_lea.vmem [#allocation4], %s342
        %v345 = vld [vmem:[%s1] sm:$0xf]
        %v346 = vld [vmem:[%s1 + $0x4] sm:$0xf]
        %v347 = vld [vmem:[%s1 + $0x8] sm:$0xf]
        %v348 = vld [vmem:[%s1 + $0xc] sm:$0xf]
        %v349 = vld [vmem:[%s1 + $0x10] sm:$0xf]
        %v350 = vld [vmem:[%s1 + $0x14] sm:$0xf]
        %v351 = vld [vmem:[%s1 + $0x18] sm:$0xf]
        %v352 = vld [vmem:[%s1 + $0x1c] sm:$0xf]
        %v353 = vld [vmem:[%s1 + $0x20] sm:$0xf]
        %v354 = vld [vmem:[%s1 + $0x24] sm:$0xf]
        %v355 = vld [vmem:[%s1 + $0x28] sm:$0xf]
        %v356 = vld [vmem:[%s1 + $0x2c] sm:$0xf]
        %v357 = vld [vmem:[%s1 + $0x30] sm:$0xf]
        %v358 = vld [vmem:[%s1 + $0x34] sm:$0xf]
        %v359 = vld [vmem:[%s1 + $0x38] sm:$0xf]
        %v360 = vld [vmem:[%s1 + $0x3c] sm:$0xf]
        %v361 = vld [vmem:[%s316] sm:$0xf]
        %v362 = vld [vmem:[%s316 + $0x4] sm:$0xf]
        %v363 = vld [vmem:[%s316 + $0x8] sm:$0xf]
        %v364 = vld [vmem:[%s316 + $0xc] sm:$0xf]
        %v365 = vld [vmem:[%s316 + $0x10] sm:$0xf]
        %v366 = vld [vmem:[%s316 + $0x14] sm:$0xf]
        %v367 = vld [vmem:[%s316 + $0x18] sm:$0xf]
        %v368 = vld [vmem:[%s2] sm:$0xff]
        %v369 = vld [vmem:[%s2 + $0x8] sm:$0xff]
        %v370 = vld [vmem:[%s2 + $0x10] sm:$0xff]
        %v371 = vld [vmem:[%s2 + $0x18] sm:$0xff]
        %v372 = vld [vmem:[%s2 + $0x20] sm:$0xff]
        %v373 = vld [vmem:[%s2 + $0x28] sm:$0xff]
        %v374 = vld [vmem:[%s2 + $0x30] sm:$0xff]
        %v375 = vld [vmem:[%s2 + $0x38] sm:$0xff]
        %v376 = vld [vmem:[%s2 + $0x40] sm:$0xff]
        %v377 = vld [vmem:[%s2 + $0x48] sm:$0xff]
        %v378 = vld [vmem:[%s2 + $0x50] sm:$0xff]
        %v379 = vld [vmem:[%s2 + $0x58] sm:$0xff]
        %v380 = vld [vmem:[%s2 + $0x60] sm:$0xff]
        %v381 = vld [vmem:[%s2 + $0x68] sm:$0xff]
        %v382 = vld [vmem:[%s2 + $0x70] sm:$0xff]
        %v383 = vld [vmem:[%s2 + $0x78] sm:$0xff]
        %385 = vset.pattern.permute.xlu0 0
        %386 = vperm.xlu0 %385, %v368
        %v387 = vpop.permute.xlu0 %386
        %390 = vset.pattern.permute.xlu0 0
        %391 = vperm.xlu0 %390, %v369
        %v392 = vpop.permute.xlu0 %391
        %395 = vset.pattern.permute.xlu0 0
        %396 = vperm.xlu0 %395, %v370
        %v397 = vpop.permute.xlu0 %396
        %400 = vset.pattern.permute.xlu0 0
        %401 = vperm.xlu0 %400, %v371
        %v402 = vpop.permute.xlu0 %401
        %405 = vset.pattern.permute.xlu0 0
        %406 = vperm.xlu0 %405, %v372
        %v407 = vpop.permute.xlu0 %406
        %410 = vset.pattern.permute.xlu0 0
        %411 = vperm.xlu0 %410, %v373
        %v412 = vpop.permute.xlu0 %411
        %415 = vset.pattern.permute.xlu0 0
        %416 = vperm.xlu0 %415, %v374
        %v417 = vpop.permute.xlu0 %416
        %420 = vset.pattern.permute.xlu0 0
        %421 = vperm.xlu0 %420, %v375
        %v422 = vpop.permute.xlu0 %421
        %425 = vset.pattern.permute.xlu0 0
        %426 = vperm.xlu0 %425, %v376
        %v427 = vpop.permute.xlu0 %426
        %430 = vset.pattern.permute.xlu0 0
        %431 = vperm.xlu0 %430, %v377
        %v432 = vpop.permute.xlu0 %431
        %435 = vset.pattern.permute.xlu0 0
        %436 = vperm.xlu0 %435, %v378
        %v437 = vpop.permute.xlu0 %436
        %440 = vset.pattern.permute.xlu0 0
        %441 = vperm.xlu0 %440, %v379
        %v442 = vpop.permute.xlu0 %441
        %445 = vset.pattern.permute.xlu0 0
        %446 = vperm.xlu0 %445, %v380
        %v447 = vpop.permute.xlu0 %446
        %450 = vset.pattern.permute.xlu0 0
        %451 = vperm.xlu0 %450, %v381
        %v452 = vpop.permute.xlu0 %451
        %455 = vset.pattern.permute.xlu0 0
        %456 = vperm.xlu0 %455, %v382
        %v457 = vpop.permute.xlu0 %456
        %460 = vset.pattern.permute.xlu0 0
        %461 = vperm.xlu0 %460, %v383
        %v462 = vpop.permute.xlu0 %461
        %v480 = vunpack.c.l.b16 %v345
        %v481 = vunpack.c.l.b16 %v346
        %v482 = vunpack.c.l.b16 %v347
        %v483 = vunpack.c.l.b16 %v348
        %v484 = vunpack.c.l.b16 %v349
        %v485 = vunpack.c.l.b16 %v350
        %v486 = vunpack.c.l.b16 %v351
        %v487 = vunpack.c.l.b16 %v352
        %v488 = vunpack.c.l.b16 %v353
        %v489 = vunpack.c.l.b16 %v354
        %v490 = vunpack.c.l.b16 %v355
        %v491 = vunpack.c.l.b16 %v356
        %v492 = vunpack.c.l.b16 %v357
        %v493 = vunpack.c.l.b16 %v358
        %v494 = vunpack.c.l.b16 %v359
        %v495 = vunpack.c.l.b16 %v360
        %v496 = vpack.c.b16 %v481, %v480
        %v497 = vpack.c.b16 %v483, %v482
        %v498 = vpack.c.b16 %v485, %v484
        %v499 = vpack.c.b16 %v487, %v486
        %v500 = vpack.c.b16 %v489, %v488
        %v501 = vpack.c.b16 %v491, %v490
        %v502 = vpack.c.b16 %v493, %v492
        %v503 = vpack.c.b16 %v495, %v494
        %v511 = vunpack.c.l.b16 %v361
        %v512 = vunpack.c.l.b16 %v362
        %v513 = vunpack.c.l.b16 %v363
        %v514 = vunpack.c.l.b16 %v364
        %v515 = vunpack.c.l.b16 %v365
        %v516 = vunpack.c.l.b16 %v366
        %v517 = vunpack.c.l.b16 %v367
        %v518 = vpack.c.b16 %v512, %v511
        %v519 = vpack.c.b16 %v514, %v513
        %v520 = vpack.c.b16 %v516, %v515
        %v521 = vpack.c.b16 %v517, %v517
        %vm525 = vcmask 457728
        %v527 = vsel %vm525, %v496, 0
        %v530 = vsel %vm525, %v497, 0
        %v533 = vsel %vm525, %v498, 0
        %v536 = vsel %vm525, %v499, 0
        %v539 = vsel %vm525, %v500, 0
        %v542 = vsel %vm525, %v501, 0
        %v545 = vsel %vm525, %v502, 0
        %v548 = vsel %vm525, %v503, 0
        %vm550 = vcmask 1043456
        %v552 = vsel %vm550, %v521, 0
        %554 = vmatprep.subr.bf16.mxu0 0
        %555 = vmatpush1.bf16.msra.mxu0 0
        %556 = vmatprep.subr.bf16.mxu0 0
        %557 = vmatpush1.bf16.msra.mxu0 0
        %558 = vmatprep.subr.bf16.mxu0 0
        %559 = vmatpush1.bf16.msra.mxu0 0
        %560 = vmatprep.subr.bf16.mxu0 0
        %561 = vmatpush1.bf16.msra.mxu0 0
        %562 = vmatprep.subr.bf16.mxu0 0
        %563 = vmatpush1.bf16.msra.mxu0 %v552
        %564 = vmatprep.subr.bf16.mxu0 0
        %565 = vmatpush1.bf16.msra.mxu0 %v520
        %566 = vmatprep.subr.bf16.mxu0 0
        %567 = vmatpush1.bf16.msra.mxu0 %v519
        %568 = vmatprep.subr.bf16.mxu0 0
        %569 = vmatpush1.bf16.msra.mxu0 %v518
        %570 = vmatprep.subr.bf16.mxu0 0
        %571 = vmatpush2.bf16.msra.mxu0 0
        %572 = vmatprep.subr.bf16.mxu0 0
        %573 = vmatpush2.bf16.msra.mxu0 0
        %574 = vmatprep.subr.bf16.mxu0 0
        %575 = vmatpush2.bf16.msra.mxu0 0
        %576 = vmatprep.subr.bf16.mxu0 0
        %577 = vmatpush2.bf16.msra.mxu0 0
        %578 = vmatprep.subr.bf16.mxu0 0
        %579 = vmatpush2.bf16.msra.mxu0 0
        %580 = vmatprep.subr.bf16.mxu0 0
        %581 = vmatpush2.bf16.msra.mxu0 0
        %582 = vmatprep.subr.bf16.mxu0 0
        %583 = vmatpush2.bf16.msra.mxu0 0
        %584 = vmatprep.subr.bf16.mxu0 0
        %585 = vmatpush2.bf16.msra.mxu0 0
        %586 = vmatprep.mubr.bf16.mxu0 0
        %587 = vmatmul.mubr.bf16.gmra.mxu0 %v527
        %v588 = vpop.f32.mrf.mxu0
        %v589 = vadd.f32 %v387, %v588
        %v590 = vpop.f32.mrf.mxu0
        %v591 = vpop.f32.mrf.mxu0
        %v592 = vadd.f32 %v392, %v591
        %v593 = vpop.f32.mrf.mxu0
        %594 = vmatprep.mubr.bf16.mxu0 0
        %595 = vmatmul.mubr.bf16.gmra.mxu0 %v530
        %v596 = vpop.f32.mrf.mxu0
        %v597 = vadd.f32 %v397, %v596
        %v598 = vpop.f32.mrf.mxu0
        %v599 = vpop.f32.mrf.mxu0
        %v600 = vadd.f32 %v402, %v599
        %v601 = vpop.f32.mrf.mxu0
        %602 = vmatprep.mubr.bf16.mxu0 0
        %603 = vmatmul.mubr.bf16.gmra.mxu0 %v533
        %v604 = vpop.f32.mrf.mxu0
        %v605 = vadd.f32 %v407, %v604
        %v606 = vpop.f32.mrf.mxu0
        %v607 = vpop.f32.mrf.mxu0
        %v608 = vadd.f32 %v412, %v607
        %v609 = vpop.f32.mrf.mxu0
        %610 = vmatprep.mubr.bf16.mxu0 0
        %611 = vmatmul.mubr.bf16.gmra.mxu0 %v536
        %v612 = vpop.f32.mrf.mxu0
        %v613 = vadd.f32 %v417, %v612
        %v614 = vpop.f32.mrf.mxu0
        %v615 = vpop.f32.mrf.mxu0
        %v616 = vadd.f32 %v422, %v615
        %v617 = vpop.f32.mrf.mxu0
        %618 = vmatprep.mubr.bf16.mxu0 0
        %619 = vmatmul.mubr.bf16.gmra.mxu0 %v539
        %v620 = vpop.f32.mrf.mxu0
        %v621 = vadd.f32 %v427, %v620
        %v622 = vpop.f32.mrf.mxu0
        %v623 = vpop.f32.mrf.mxu0
        %v624 = vadd.f32 %v432, %v623
        %v625 = vpop.f32.mrf.mxu0
        %626 = vmatprep.mubr.bf16.mxu0 0
        %627 = vmatmul.mubr.bf16.gmra.mxu0 %v542
        %v628 = vpop.f32.mrf.mxu0
        %v629 = vadd.f32 %v437, %v628
        %v630 = vpop.f32.mrf.mxu0
        %v631 = vpop.f32.mrf.mxu0
        %v632 = vadd.f32 %v442, %v631
        %v633 = vpop.f32.mrf.mxu0
        %634 = vmatprep.mubr.bf16.mxu0 0
        %635 = vmatmul.mubr.bf16.gmra.mxu0 %v545
        %v636 = vpop.f32.mrf.mxu0
        %v637 = vadd.f32 %v447, %v636
        %v638 = vpop.f32.mrf.mxu0
        %v639 = vpop.f32.mrf.mxu0
        %v640 = vadd.f32 %v452, %v639
        %v641 = vpop.f32.mrf.mxu0
        %642 = vmatprep.mubr.bf16.mxu0 0
        %643 = vmatmul.mubr.bf16.gmra.mxu0 %v548
        %v644 = vpop.f32.mrf.mxu0
        %v645 = vadd.f32 %v457, %v644
        %v646 = vpop.f32.mrf.mxu0
        %v647 = vpop.f32.mrf.mxu0
        %v648 = vadd.f32 %v462, %v647
        %v649 = vpop.f32.mrf.mxu0
        %650 = vdwg.mxu0
        %v651 = vmax.f32 %v589, 0.0
        %v652 = vmax.f32 %v592, 0.0
        %v653 = vmax.f32 %v597, 0.0
        %v654 = vmax.f32 %v600, 0.0
        %v655 = vmax.f32 %v605, 0.0
        %v656 = vmax.f32 %v608, 0.0
        %v657 = vmax.f32 %v613, 0.0
        %v658 = vmax.f32 %v616, 0.0
        %v659 = vmax.f32 %v621, 0.0
        %v660 = vmax.f32 %v624, 0.0
        %v661 = vmax.f32 %v629, 0.0
        %v662 = vmax.f32 %v632, 0.0
        %v663 = vmax.f32 %v637, 0.0
        %v664 = vmax.f32 %v640, 0.0
        %v665 = vmax.f32 %v645, 0.0
        %v666 = vmax.f32 %v648, 0.0
        %v667 = vld [vmem:[%s3] sm:$0xf]
        %v668 = vld [vmem:[%s3 + $0x4] sm:$0xf]
        %v669 = vld [vmem:[%s3 + $0x8] sm:$0xf]
        %v670 = vld [vmem:[%s3 + $0xc] sm:$0xf]
        %v671 = vld [vmem:[%s3 + $0x10] sm:$0xf]
        %v672 = vld [vmem:[%s3 + $0x14] sm:$0xf]
        %v673 = vld [vmem:[%s3 + $0x18] sm:$0xf]
        %v674 = vld [vmem:[%s3 + $0x1c] sm:$0xf]
        %v675 = vld [vmem:[%s3 + $0x20] sm:$0xf]
        %v676 = vld [vmem:[%s3 + $0x24] sm:$0xf]
        %v677 = vld [vmem:[%s3 + $0x28] sm:$0xf]
        %v678 = vld [vmem:[%s3 + $0x2c] sm:$0xf]
        %v679 = vld [vmem:[%s3 + $0x30] sm:$0xf]
        %v680 = vld [vmem:[%s3 + $0x34] sm:$0xf]
        %v681 = vld [vmem:[%s3 + $0x38] sm:$0xf]
        %v682 = vld [vmem:[%s3 + $0x3c] sm:$0xf]
        %v683 = vpack.c.bf16 %v652, %v651
        %v684 = vpack.c.bf16 %v654, %v653
        %v685 = vpack.c.bf16 %v656, %v655
        %v686 = vpack.c.bf16 %v658, %v657
        %v687 = vpack.c.bf16 %v660, %v659
        %v688 = vpack.c.bf16 %v662, %v661
        %v689 = vpack.c.bf16 %v664, %v663
        %v690 = vpack.c.bf16 %v666, %v665
        %v691 = vld [vmem:[%s4] sm:$0xff]
        %v692 = vld [vmem:[%s4 + $0x8] sm:$0xff]
        %v693 = vld [vmem:[%s4 + $0x10] sm:$0xff]
        %v694 = vld [vmem:[%s4 + $0x18] sm:$0xff]
        %v695 = vld [vmem:[%s4 + $0x20] sm:$0xff]
        %v696 = vld [vmem:[%s4 + $0x28] sm:$0xff]
        %v697 = vld [vmem:[%s4 + $0x30] sm:$0xff]
        %v698 = vld [vmem:[%s4 + $0x38] sm:$0xff]
        %v699 = vld [vmem:[%s4 + $0x40] sm:$0xff]
        %v700 = vld [vmem:[%s4 + $0x48] sm:$0xff]
        %v701 = vld [vmem:[%s4 + $0x50] sm:$0xff]
        %v702 = vld [vmem:[%s4 + $0x58] sm:$0xff]
        %v703 = vld [vmem:[%s4 + $0x60] sm:$0xff]
        %v704 = vld [vmem:[%s4 + $0x68] sm:$0xff]
        %v705 = vld [vmem:[%s4 + $0x70] sm:$0xff]
        %v706 = vld [vmem:[%s4 + $0x78] sm:$0xff]
        %708 = vset.pattern.permute.xlu0 0
        %709 = vperm.xlu0 %708, %v691
        %v710 = vpop.permute.xlu0 %709
        %713 = vset.pattern.permute.xlu0 0
        %714 = vperm.xlu0 %713, %v692
        %v715 = vpop.permute.xlu0 %714
        %718 = vset.pattern.permute.xlu0 0
        %719 = vperm.xlu0 %718, %v693
        %v720 = vpop.permute.xlu0 %719
        %723 = vset.pattern.permute.xlu0 0
        %724 = vperm.xlu0 %723, %v694
        %v725 = vpop.permute.xlu0 %724
        %728 = vset.pattern.permute.xlu0 0
        %729 = vperm.xlu0 %728, %v695
        %v730 = vpop.permute.xlu0 %729
        %733 = vset.pattern.permute.xlu0 0
        %734 = vperm.xlu0 %733, %v696
        %v735 = vpop.permute.xlu0 %734
        %738 = vset.pattern.permute.xlu0 0
        %739 = vperm.xlu0 %738, %v697
        %v740 = vpop.permute.xlu0 %739
        %743 = vset.pattern.permute.xlu0 0
        %744 = vperm.xlu0 %743, %v698
        %v745 = vpop.permute.xlu0 %744
        %748 = vset.pattern.permute.xlu0 0
        %749 = vperm.xlu0 %748, %v699
        %v750 = vpop.permute.xlu0 %749
        %753 = vset.pattern.permute.xlu0 0
        %754 = vperm.xlu0 %753, %v700
        %v755 = vpop.permute.xlu0 %754
        %758 = vset.pattern.permute.xlu0 0
        %759 = vperm.xlu0 %758, %v701
        %v760 = vpop.permute.xlu0 %759
        %763 = vset.pattern.permute.xlu0 0
        %764 = vperm.xlu0 %763, %v702
        %v765 = vpop.permute.xlu0 %764
        %768 = vset.pattern.permute.xlu0 0
        %769 = vperm.xlu0 %768, %v703
        %v770 = vpop.permute.xlu0 %769
        %773 = vset.pattern.permute.xlu0 0
        %774 = vperm.xlu0 %773, %v704
        %v775 = vpop.permute.xlu0 %774
        %778 = vset.pattern.permute.xlu0 0
        %779 = vperm.xlu0 %778, %v705
        %v780 = vpop.permute.xlu0 %779
        %783 = vset.pattern.permute.xlu0 0
        %784 = vperm.xlu0 %783, %v706
        %v785 = vpop.permute.xlu0 %784
        %v803 = vunpack.c.l.b16 %v667
        %v804 = vunpack.c.l.b16 %v668
        %v805 = vunpack.c.l.b16 %v669
        %v806 = vunpack.c.l.b16 %v670
        %v807 = vunpack.c.l.b16 %v671
        %v808 = vunpack.c.l.b16 %v672
        %v809 = vunpack.c.l.b16 %v673
        %v810 = vunpack.c.l.b16 %v674
        %v811 = vunpack.c.l.b16 %v675
        %v812 = vunpack.c.l.b16 %v676
        %v813 = vunpack.c.l.b16 %v677
        %v814 = vunpack.c.l.b16 %v678
        %v815 = vunpack.c.l.b16 %v679
        %v816 = vunpack.c.l.b16 %v680
        %v817 = vunpack.c.l.b16 %v681
        %v818 = vunpack.c.l.b16 %v682
        %v819 = vpack.c.b16 %v804, %v803
        %v820 = vpack.c.b16 %v806, %v805
        %v821 = vpack.c.b16 %v808, %v807
        %v822 = vpack.c.b16 %v810, %v809
        %v823 = vpack.c.b16 %v812, %v811
        %v824 = vpack.c.b16 %v814, %v813
        %v825 = vpack.c.b16 %v816, %v815
        %v826 = vpack.c.b16 %v818, %v817
        %835 = vmatprep.subr.bf16.mxu0 0
        %836 = vmatpush1.bf16.msra.mxu0 %v690
        %837 = vmatprep.subr.bf16.mxu0 0
        %838 = vmatpush1.bf16.msra.mxu0 %v689
        %839 = vmatprep.subr.bf16.mxu0 0
        %840 = vmatpush1.bf16.msra.mxu0 %v688
        %841 = vmatprep.subr.bf16.mxu0 0
        %842 = vmatpush1.bf16.msra.mxu0 %v687
        %843 = vmatprep.subr.bf16.mxu0 0
        %844 = vmatpush1.bf16.msra.mxu0 %v686
        %845 = vmatprep.subr.bf16.mxu0 0
        %846 = vmatpush1.bf16.msra.mxu0 %v685
        %847 = vmatprep.subr.bf16.mxu0 0
        %848 = vmatpush1.bf16.msra.mxu0 %v684
        %849 = vmatprep.subr.bf16.mxu0 0
        %850 = vmatpush1.bf16.msra.mxu0 %v683
        %851 = vmatprep.subr.bf16.mxu0 0
        %852 = vmatpush2.bf16.msra.mxu0 0
        %853 = vmatprep.subr.bf16.mxu0 0
        %854 = vmatpush2.bf16.msra.mxu0 0
        %855 = vmatprep.subr.bf16.mxu0 0
        %856 = vmatpush2.bf16.msra.mxu0 0
        %857 = vmatprep.subr.bf16.mxu0 0
        %858 = vmatpush2.bf16.msra.mxu0 0
        %859 = vmatprep.subr.bf16.mxu0 0
        %860 = vmatpush2.bf16.msra.mxu0 0
        %861 = vmatprep.subr.bf16.mxu0 0
        %862 = vmatpush2.bf16.msra.mxu0 0
        %863 = vmatprep.subr.bf16.mxu0 0
        %864 = vmatpush2.bf16.msra.mxu0 0
        %865 = vmatprep.subr.bf16.mxu0 0
        %866 = vmatpush2.bf16.msra.mxu0 0
        %867 = vmatprep.mubr.bf16.mxu0 0
        %868 = vmatmul.mubr.bf16.gmra.mxu0 %v819
        %v869 = vpop.f32.mrf.mxu0
        %v870 = vadd.f32 %v710, %v869
        %v871 = vpop.f32.mrf.mxu0
        %v872 = vpop.f32.mrf.mxu0
        %v873 = vadd.f32 %v715, %v872
        %v874 = vpop.f32.mrf.mxu0
        %875 = vmatprep.mubr.bf16.mxu0 0
        %876 = vmatmul.mubr.bf16.gmra.mxu0 %v820
        %v877 = vpop.f32.mrf.mxu0
        %v878 = vadd.f32 %v720, %v877
        %v879 = vpop.f32.mrf.mxu0
        %v880 = vpop.f32.mrf.mxu0
        %v881 = vadd.f32 %v725, %v880
        %v882 = vpop.f32.mrf.mxu0
        %883 = vmatprep.mubr.bf16.mxu0 0
        %884 = vmatmul.mubr.bf16.gmra.mxu0 %v821
        %v885 = vpop.f32.mrf.mxu0
        %v886 = vadd.f32 %v730, %v885
        %v887 = vpop.f32.mrf.mxu0
        %v888 = vpop.f32.mrf.mxu0
        %v889 = vadd.f32 %v735, %v888
        %v890 = vpop.f32.mrf.mxu0
        %891 = vmatprep.mubr.bf16.mxu0 0
        %892 = vmatmul.mubr.bf16.gmra.mxu0 %v822
        %v893 = vpop.f32.mrf.mxu0
        %v894 = vadd.f32 %v740, %v893
        %v895 = vpop.f32.mrf.mxu0
        %v896 = vpop.f32.mrf.mxu0
        %v897 = vadd.f32 %v745, %v896
        %v898 = vpop.f32.mrf.mxu0
        %899 = vmatprep.mubr.bf16.mxu0 0
        %900 = vmatmul.mubr.bf16.gmra.mxu0 %v823
        %v901 = vpop.f32.mrf.mxu0
        %v902 = vadd.f32 %v750, %v901
        %v903 = vpop.f32.mrf.mxu0
        %v904 = vpop.f32.mrf.mxu0
        %v905 = vadd.f32 %v755, %v904
        %v906 = vpop.f32.mrf.mxu0
        %907 = vmatprep.mubr.bf16.mxu0 0
        %908 = vmatmul.mubr.bf16.gmra.mxu0 %v824
        %v909 = vpop.f32.mrf.mxu0
        %v910 = vadd.f32 %v760, %v909
        %v911 = vpop.f32.mrf.mxu0
        %v912 = vpop.f32.mrf.mxu0
        %v913 = vadd.f32 %v765, %v912
        %v914 = vpop.f32.mrf.mxu0
        %915 = vmatprep.mubr.bf16.mxu0 0
        %916 = vmatmul.mubr.bf16.gmra.mxu0 %v825
        %v917 = vpop.f32.mrf.mxu0
        %v918 = vadd.f32 %v770, %v917
        %v919 = vpop.f32.mrf.mxu0
        %v920 = vpop.f32.mrf.mxu0
        %v921 = vadd.f32 %v775, %v920
        %v922 = vpop.f32.mrf.mxu0
        %923 = vmatprep.mubr.bf16.mxu0 0
        %924 = vmatmul.mubr.bf16.gmra.mxu0 %v826
        %v925 = vpop.f32.mrf.mxu0
        %v926 = vadd.f32 %v780, %v925
        %v927 = vpop.f32.mrf.mxu0
        %v928 = vpop.f32.mrf.mxu0
        %v929 = vadd.f32 %v785, %v928
        %v930 = vpop.f32.mrf.mxu0
        %931 = vdwg.mxu0
        %v932 = vmax.f32 %v870, 0.0
        %v933 = vmax.f32 %v873, 0.0
        %v934 = vmax.f32 %v878, 0.0
        %v935 = vmax.f32 %v881, 0.0
        %v936 = vmax.f32 %v886, 0.0
        %v937 = vmax.f32 %v889, 0.0
        %v938 = vmax.f32 %v894, 0.0
        %v939 = vmax.f32 %v897, 0.0
        %v940 = vmax.f32 %v902, 0.0
        %v941 = vmax.f32 %v905, 0.0
        %v942 = vmax.f32 %v910, 0.0
        %v943 = vmax.f32 %v913, 0.0
        %v944 = vmax.f32 %v918, 0.0
        %v945 = vmax.f32 %v921, 0.0
        %v946 = vmax.f32 %v926, 0.0
        %v947 = vmax.f32 %v929, 0.0
        %v948 = vld [vmem:[%s5] sm:$0xff]
        %v949 = vld [vmem:[%s5 + $0x8] sm:$0xff]
        %v950 = vld [vmem:[%s5 + $0x10] sm:$0xff]
        %v951 = vld [vmem:[%s5 + $0x18] sm:$0xff]
        %v952 = vld [vmem:[%s5 + $0x20] sm:$0xff]
        %v953 = vld [vmem:[%s5 + $0x28] sm:$0xff]
        %v954 = vld [vmem:[%s5 + $0x30] sm:$0xff]
        %v955 = vld [vmem:[%s5 + $0x38] sm:$0xff]
        %v956 = vld [vmem:[%s5 + $0x40] sm:$0xff]
        %v957 = vld [vmem:[%s5 + $0x48] sm:$0xff]
        %v958 = vld [vmem:[%s5 + $0x50] sm:$0xff]
        %v959 = vld [vmem:[%s5 + $0x58] sm:$0xff]
        %v960 = vld [vmem:[%s5 + $0x60] sm:$0xff]
        %v961 = vld [vmem:[%s5 + $0x68] sm:$0xff]
        %v962 = vld [vmem:[%s5 + $0x70] sm:$0xff]
        %v963 = vld [vmem:[%s5 + $0x78] sm:$0xff]
        %965 = vset.pattern.permute.xlu0 0
        %966 = vperm.xlu0 %965, %v948
        %v967 = vpop.permute.xlu0 %966
        %970 = vset.pattern.permute.xlu0 0
        %971 = vperm.xlu0 %970, %v949
        %v972 = vpop.permute.xlu0 %971
        %975 = vset.pattern.permute.xlu0 0
        %976 = vperm.xlu0 %975, %v950
        %v977 = vpop.permute.xlu0 %976
        %980 = vset.pattern.permute.xlu0 0
        %981 = vperm.xlu0 %980, %v951
        %v982 = vpop.permute.xlu0 %981
        %985 = vset.pattern.permute.xlu0 0
        %986 = vperm.xlu0 %985, %v952
        %v987 = vpop.permute.xlu0 %986
        %990 = vset.pattern.permute.xlu0 0
        %991 = vperm.xlu0 %990, %v953
        %v992 = vpop.permute.xlu0 %991
        %995 = vset.pattern.permute.xlu0 0
        %996 = vperm.xlu0 %995, %v954
        %v997 = vpop.permute.xlu0 %996
        %1000 = vset.pattern.permute.xlu0 0
        %1001 = vperm.xlu0 %1000, %v955
        %v1002 = vpop.permute.xlu0 %1001
        %1005 = vset.pattern.permute.xlu0 0
        %1006 = vperm.xlu0 %1005, %v956
        %v1007 = vpop.permute.xlu0 %1006
        %1010 = vset.pattern.permute.xlu0 0
        %1011 = vperm.xlu0 %1010, %v957
        %v1012 = vpop.permute.xlu0 %1011
        %1015 = vset.pattern.permute.xlu0 0
        %1016 = vperm.xlu0 %1015, %v958
        %v1017 = vpop.permute.xlu0 %1016
        %1020 = vset.pattern.permute.xlu0 0
        %1021 = vperm.xlu0 %1020, %v959
        %v1022 = vpop.permute.xlu0 %1021
        %1025 = vset.pattern.permute.xlu0 0
        %1026 = vperm.xlu0 %1025, %v960
        %v1027 = vpop.permute.xlu0 %1026
        %1030 = vset.pattern.permute.xlu0 0
        %1031 = vperm.xlu0 %1030, %v961
        %v1032 = vpop.permute.xlu0 %1031
        %1035 = vset.pattern.permute.xlu0 0
        %1036 = vperm.xlu0 %1035, %v962
        %v1037 = vpop.permute.xlu0 %1036
        %1040 = vset.pattern.permute.xlu0 0
        %1041 = vperm.xlu0 %1040, %v963
        %v1042 = vpop.permute.xlu0 %1041
        %v1044 = vmul.f32 %v932, %v967
        %v1045 = vmul.f32 %v933, %v972
        %v1046 = vmul.f32 %v934, %v977
        %v1047 = vmul.f32 %v935, %v982
        %v1048 = vmul.f32 %v936, %v987
        %v1049 = vmul.f32 %v937, %v992
        %v1050 = vmul.f32 %v938, %v997
        %v1051 = vmul.f32 %v939, %v1002
        %v1052 = vmul.f32 %v940, %v1007
        %v1053 = vmul.f32 %v941, %v1012
        %v1054 = vmul.f32 %v942, %v1017
        %v1055 = vmul.f32 %v943, %v1022
        %v1056 = vmul.f32 %v944, %v1027
        %v1057 = vmul.f32 %v945, %v1032
        %v1058 = vmul.f32 %v946, %v1037
        %v1059 = vmul.f32 %v947, %v1042
        %v1060 = vadd.f32 %v1044, %v1045
        %v1061 = vadd.f32 %v1060, %v1046
        %v1062 = vadd.f32 %v1061, %v1047
        %v1063 = vadd.f32 %v1062, %v1048
        %v1064 = vadd.f32 %v1063, %v1049
        %v1065 = vadd.f32 %v1064, %v1050
        %v1066 = vadd.f32 %v1065, %v1051
        %v1067 = vadd.f32 %v1066, %v1052
        %v1068 = vadd.f32 %v1067, %v1053
        %v1069 = vadd.f32 %v1068, %v1054
        %v1070 = vadd.f32 %v1069, %v1055
        %v1071 = vadd.f32 %v1070, %v1056
        %v1072 = vadd.f32 %v1071, %v1057
        %v1073 = vadd.f32 %v1072, %v1058
        %v1074 = vadd.f32 %v1073, %v1059
        %v1075 = vrot.slane %v1074, 4
        %v1076 = vadd.f32 %v1074, %v1075
        %v1077 = vrot.slane %v1076, 2
        %v1078 = vadd.f32 %v1076, %v1077
        %v1079 = vrot.slane %v1078, 1
        %v1080 = vadd.f32 %v1078, %v1079
        %s1081 = sld [smem:[#allocation2]]
        %v1082 = vstv %s1081
        %v1083 = vadd.f32 %v1080, %v1082
        %1084 = vst [vmem:[%s343] sm:$0x1] %v1083
        %s1085 = sand.u32 %s182, 1
        %s1086 = scalar_lea.sflag [#allocation5], %s1085
        %s1087 = sand.u32 %s182, 1
        %s1088 = scalar_lea.vmem [#allocation4], %s1087
        // Predicated region
        $region90: #{tpu_custom_call.1} parent=84 // pred_check
          %p1089 = pneg %p192
        $region91: #{tpu_custom_call.1} parent=84 // pred_check_branch
          %1091 = sbr.rel (%p1089) target = $region93
        $region92: #{tpu_custom_call.1} parent=84 // pred_region
          %s1093 = ssub.s32 16, 16
          %1094 = vsyncadd %s1086, %s1093
          %s1095 = smul.addr %s22, 16
          %s1096 = scalar_lea.hbm %s7, %s1095
          %s1098 = sshll.u32 %s1088, 4
          %s1099 = int_to_ptr.vmem [resolvable:$true] %s1098
          %1101 = dma.vmem_to_hbm [thread:$0]  %s1099, 16, %s1096, %s1086
        $region93: #{tpu_custom_call.1} parent=84 // pred_fallthru
          _
      $region85: #{tpu_custom_call.1} parent=5 // pred_fallthru
        _
      %p1102 = scmp.le.s32.totalorder 2, %s17
      // Predicated region
      $region94: #{tpu_custom_call.1} parent=5 // pred_check
        %p1103 = pneg %p1102
      $region95: #{tpu_custom_call.1} parent=5 // pred_check_branch
        %1105 = sbr.rel (%p1103) target = $region97
      $region96: #{tpu_custom_call.1} parent=5 // pred_region
        %s1106 = ssub.s32 %s17, 2
        // Predicated region
        $region98: #{tpu_custom_call.1} parent=96 // pred_check
          %p1107 = pneg %p198
        $region99: #{tpu_custom_call.1} parent=96 // pred_check_branch
          %1109 = sbr.rel (%p1107) target = $region101
        $region100: #{tpu_custom_call.1} parent=96 // pred_region
          %s1110 = sand.u32 %s183, 1
          %s1111 = scalar_lea.sflag [#allocation5], %s1110
          %s1112 = sand.u32 %s183, 1
          %s1113 = scalar_lea.vmem [#allocation4], %s1112
          %1114 = dma.done %s1111, 16
        $region101: #{tpu_custom_call.1} parent=96 // pred_fallthru
          _
      $region97: #{tpu_custom_call.1} parent=5 // pred_fallthru
        _
    $region6: #{tpu_custom_call.1} parent=1 // loop_footer
      %s21 = sadd.s32 1, %s17
    $region7: #{tpu_custom_call.1} parent=1 // loop_footer_branch
      %16 = sbr.rel target = $region3
    $region8: #{tpu_custom_call.1} parent=1 // loop_exit
      _
    %1115 = vsyncpa [#allocation5], 1
    %s1116 = scalar_lea.sflag [#allocation5], 1
    %1117 = vsyncpa %s1116, 1

</llo_original>
